<compile_context>
chip_gen: v5e
topology: v5e:2x2
jax: 0.10.0
libtpu: 0.0.40
codegen_flags: <defaults>
</compile_context>

<pallas_src>
import math
import functools

import jax
import jax.numpy as jnp
from jax.experimental import pallas as pl
from jax.experimental.pallas import tpu as pltpu

LN_EPS = 1e-5  # PyTorch nn.LayerNorm default


def _layernorm(x, gamma, beta):
    # x: (T, C) f32; gamma/beta: (1, C)
    mu = jnp.mean(x, axis=-1, keepdims=True)
    xc = x - mu
    var = jnp.mean(xc * xc, axis=-1, keepdims=True)
    return xc * jax.lax.rsqrt(var + LN_EPS) * gamma + beta


def block_kernel(x_ref, g1_ref, b1_ref, w_attn_ref, b_attn_ref,
                 g2_ref, b2_ref, w_fc_ref, b_fc_ref, w_proj_ref, b_proj_ref,
                 o_ref, *, n_head):
    # x_ref / o_ref: (1, T, C).  All weights fully VMEM-resident at these sizes.
    # TODO(synk): for production shapes (C=768, T=1024) tile the (C,3C)/(C,4C)
    # weights over K/N with an f32 accumulator and use flash-style KV tiling
    # instead of the full (T,T) score matrix (required to fit v7x's 64 MiB VMEM).
    x = x_ref[0].astype(jnp.float32)                          # (T, C)
    T, C = x.shape
    D = C // n_head
    scale = 1.0 / math.sqrt(D)

    # ---- LayerNorm 1 ----
    xn = _layernorm(x, g1_ref[...], b1_ref[...])

    # ---- fused QKV projection (single MXU matmul, stays in VMEM/vregs) ----
    qkv = jnp.dot(xn, w_attn_ref[...], preferred_element_type=jnp.float32)
    qkv = qkv + b_attn_ref[...]                               # (T, 3C)

    # Pre-scale Q once for all heads: one (T, C) vmul instead of T*T per head.
    q_all = qkv[:, :C] * scale                                # (T, C)
    k_all = qkv[:, C:2 * C]                                   # (T, C)
    v_all = qkv[:, 2 * C:]                                    # (T, C)

    # ---- causal multi-head attention: all heads in one grid step ----
    row = jax.lax.broadcasted_iota(jnp.int32, (T, T), 0)
    col = jax.lax.broadcasted_iota(jnp.int32, (T, T), 1)
    causal = row >= col                                       # built once, reused per head

    heads = []
    for h in range(n_head):                                   # unrolled at trace time
        lo = h * D
        q = q_all[:, lo:lo + D]
        k = k_all[:, lo:lo + D]
        v = v_all[:, lo:lo + D]
        # contract last dims directly — no k.T relayout before the MXU
        s = jax.lax.dot_general(q, k, (((1,), (1,)), ((), ())),
                                preferred_element_type=jnp.float32)   # (T, T)
        s = jnp.where(causal, s, -jnp.inf)
        m = jnp.max(s, axis=-1, keepdims=True)                # XLU reduce
        p = jnp.exp(s - m)                                    # EUP
        denom = jnp.sum(p, axis=-1, keepdims=True)
        p = p * pl.reciprocal(denom, approx=True)             # EUP slot, VALU-free
        heads.append(jnp.dot(p, v, preferred_element_type=jnp.float32))
    y = jnp.concatenate(heads, axis=-1)                       # (T, C) — lane-dense merge

    # NOTE: this module's CasualSelfAttention has no output projection (matches spec).
    x1 = x + y                                                # residual 1

    # ---- LayerNorm 2 + MLP ----
    xn2 = _layernorm(x1, g2_ref[...], b2_ref[...])
    hmid = jnp.dot(xn2, w_fc_ref[...], preferred_element_type=jnp.float32)
    hmid = jax.nn.gelu(hmid + b_fc_ref[...], approximate=True)
    # TODO(synk): PyTorch nn.GELU() default is the exact erf form; the tanh
    # approximation is used for a guaranteed Mosaic lowering path (diff ~1e-3).
    mlp = jnp.dot(hmid, w_proj_ref[...], preferred_element_type=jnp.float32)
    mlp = mlp + b_proj_ref[...]

    o_ref[0] = (x1 + mlp).astype(o_ref.dtype)                 # residual 2, (1, T, C)


def transformer_block(x, params, n_head):
    """Full Block forward: x + attn(ln1(x)); then + mlp(ln2(.)). x: (B, T, C)."""
    B, T, C = x.shape
    assert C % n_head == 0
    H3, FF = 3 * C, 4 * C

    def full(shape):
        # constant index map -> Pallas keeps the block resident across the grid
        return pl.BlockSpec(shape, lambda b, _n=len(shape): (0,) * _n)

    return pl.pallas_call(
        functools.partial(block_kernel, n_head=n_head),
        out_shape=jax.ShapeDtypeStruct((B, T, C), x.dtype),
        grid=(B,),
        in_specs=[
            pl.BlockSpec((1, T, C), lambda b: (b, 0, 0)),     # x
            full((1, C)), full((1, C)),                       # ln1 gamma, beta
            full((C, H3)), full((1, H3)),                     # c_attn W, b
            full((1, C)), full((1, C)),                       # ln2 gamma, beta
            full((C, FF)), full((1, FF)),                     # fc1 W, b
            full((FF, C)), full((1, C)),                      # c_proj W, b
        ],
        out_specs=pl.BlockSpec((1, T, C), lambda b: (b, 0, 0)),
        compiler_params=pltpu.CompilerParams(
            dimension_semantics=("parallel",)),
    )(x,
      params["g1"].reshape(1, C), params["b1"].reshape(1, C),
      params["w_attn"], params["b_attn"].reshape(1, H3),
      params["g2"].reshape(1, C), params["b2"].reshape(1, C),
      params["w_fc"], params["b_fc"].reshape(1, FF),
      params["w_proj"], params["b_proj"].reshape(1, C))


# ---------------------------------------------------------------------------
# Pure-JAX reference of Block.forward (same GELU approximation)
# ---------------------------------------------------------------------------
def block_reference(x, params, n_head):
    B, T, C = x.shape
    D = C // n_head

    def ln(t, g, b):
        mu = t.mean(-1, keepdims=True)
        var = ((t - mu) ** 2).mean(-1, keepdims=True)
        return (t - mu) / jnp.sqrt(var + LN_EPS) * g + b

    xn = ln(x, params["g1"], params["b1"])
    qkv = xn @ params["w_attn"] + params["b_attn"]
    q, k, v = jnp.split(qkv, 3, axis=-1)
    q = q.reshape(B, T, n_head, D).transpose(0, 2, 1, 3)
    k = k.reshape(B, T, n_head, D).transpose(0, 2, 1, 3)
    v = v.reshape(B, T, n_head, D).transpose(0, 2, 1, 3)
    s = jnp.einsum("bhqd,bhkd->bhqk", q, k) / math.sqrt(D)
    mask = jnp.tril(jnp.ones((T, T), dtype=bool))
    s = jnp.where(mask[None, None], s, -jnp.inf)
    p = jax.nn.softmax(s, axis=-1)
    y = jnp.einsum("bhqk,bhkd->bhqd", p, v).transpose(0, 2, 1, 3).reshape(B, T, C)
    x1 = x + y
    xn2 = ln(x1, params["g2"], params["b2"])
    hmid = jax.nn.gelu(xn2 @ params["w_fc"] + params["b_fc"], approximate=True)
    return x1 + hmid @ params["w_proj"] + params["b_proj"]


if __name__ == "__main__":
    # Small, module-consistent shapes: n_embd=32, n_head=4 (head_size=8), T=16, B=2
    B, T, C, H = 2, 16, 32, 4
    key = jax.random.PRNGKey(0)
    keys = jax.random.split(key, 11)

    def uni(k, shape, fan_in):
        bound = 1.0 / math.sqrt(fan_in)
        return jax.random.uniform(k, shape, minval=-bound, maxval=bound,
                                  dtype=jnp.float32)

    x = jax.random.normal(keys[0], (B, T, C), dtype=jnp.float32)
    params = dict(
        g1=1.0 + 0.1 * jax.random.normal(keys[1], (C,), dtype=jnp.float32),
        b1=0.1 * jax.random.normal(keys[2], (C,), dtype=jnp.float32),
        w_attn=uni(keys[3], (C, 3 * C), C),        # torch Linear weight, pre-transposed
        b_attn=uni(keys[4], (3 * C,), C),
        g2=1.0 + 0.1 * jax.random.normal(keys[5], (C,), dtype=jnp.float32),
        b2=0.1 * jax.random.normal(keys[6], (C,), dtype=jnp.float32),
        w_fc=uni(keys[7], (C, 4 * C), C),
        b_fc=uni(keys[8], (4 * C,), C),
        w_proj=uni(keys[9], (4 * C, C), 4 * C),
        b_proj=uni(keys[10], (C,), 4 * C),
    )

    y = transformer_block(x, params, H)
    y = jax.block_until_ready(y)

    y_ref = block_reference(x, params, H)
    assert y.shape == (B, T, C)
    max_err = float(jnp.max(jnp.abs(y - y_ref)))
    # tolerance loosened for pl.reciprocal(approx=True) in the softmax denominator
    assert jnp.allclose(y, y_ref, atol=1e-2, rtol=1e-2), f"mismatch vs reference: {max_err}"

    print("KERNEL_OK")
</pallas_src>

<mosaic_0001>
module attributes {stable_mosaic.version = 11 : i64} {
  func.func @block_kernel(%arg0: i32, %arg1: memref<1x16x32xf32, #tpu.memory_space<vmem>>, %arg2: memref<1x32xf32, #tpu.memory_space<vmem>>, %arg3: memref<1x32xf32, #tpu.memory_space<vmem>>, %arg4: memref<32x96xf32, #tpu.memory_space<vmem>>, %arg5: memref<1x96xf32, #tpu.memory_space<vmem>>, %arg6: memref<1x32xf32, #tpu.memory_space<vmem>>, %arg7: memref<1x32xf32, #tpu.memory_space<vmem>>, %arg8: memref<32x128xf32, #tpu.memory_space<vmem>>, %arg9: memref<1x128xf32, #tpu.memory_space<vmem>>, %arg10: memref<128x32xf32, #tpu.memory_space<vmem>>, %arg11: memref<1x32xf32, #tpu.memory_space<vmem>>, %arg12: memref<1x16x32xf32, #tpu.memory_space<vmem>>) attributes {dimension_semantics = [#tpu.dimension_semantics<parallel>], iteration_bounds = array<i64: 2>, scalar_prefetch = 0 : i64, scratch_operands = 0 : i64, tpu.core_type = #tpu.core_type<tc>, window_params = [{transform_indices = @transform_0, window_bounds = array<i64: 1, 16, 32>}, {pipeline_mode = #tpu.pipeline_mode<synchronous>, transform_indices = @transform_1, window_bounds = array<i64: 1, 32>}, {pipeline_mode = #tpu.pipeline_mode<synchronous>, transform_indices = @transform_2, window_bounds = array<i64: 1, 32>}, {pipeline_mode = #tpu.pipeline_mode<synchronous>, transform_indices = @transform_3, window_bounds = array<i64: 32, 96>}, {pipeline_mode = #tpu.pipeline_mode<synchronous>, transform_indices = @transform_4, window_bounds = array<i64: 1, 96>}, {pipeline_mode = #tpu.pipeline_mode<synchronous>, transform_indices = @transform_5, window_bounds = array<i64: 1, 32>}, {pipeline_mode = #tpu.pipeline_mode<synchronous>, transform_indices = @transform_6, window_bounds = array<i64: 1, 32>}, {pipeline_mode = #tpu.pipeline_mode<synchronous>, transform_indices = @transform_7, window_bounds = array<i64: 32, 128>}, {pipeline_mode = #tpu.pipeline_mode<synchronous>, transform_indices = @transform_8, window_bounds = array<i64: 1, 128>}, {pipeline_mode = #tpu.pipeline_mode<synchronous>, transform_indices = @transform_9, window_bounds = array<i64: 128, 32>}, {pipeline_mode = #tpu.pipeline_mode<synchronous>, transform_indices = @transform_10, window_bounds = array<i64: 1, 32>}, {transform_indices = @transform_11, window_bounds = array<i64: 1, 16, 32>}]} {
    %c0 = arith.constant 0 : index
    %c0_0 = arith.constant 0 : index
    %c0_1 = arith.constant 0 : index
    %0 = vector.load %arg1[%c0, %c0_0, %c0_1] : memref<1x16x32xf32, #tpu.memory_space<vmem>>, vector<1x16x32xf32>
    %1 = vector.shape_cast %0 : vector<1x16x32xf32> to vector<16x32xf32>
    %c0_2 = arith.constant 0 : index
    %c0_3 = arith.constant 0 : index
    %2 = vector.load %arg2[%c0_2, %c0_3] : memref<1x32xf32, #tpu.memory_space<vmem>>, vector<1x32xf32>
    %c0_4 = arith.constant 0 : index
    %c0_5 = arith.constant 0 : index
    %3 = vector.load %arg3[%c0_4, %c0_5] : memref<1x32xf32, #tpu.memory_space<vmem>>, vector<1x32xf32>
    %cst = arith.constant dense<0.000000e+00> : vector<16xf32>
    %4 = vector.multi_reduction <add>, %1, %cst [1] : vector<16x32xf32> to vector<16xf32>
    %5 = vector.shape_cast %4 : vector<16xf32> to vector<16x1xf32>
    %cst_6 = arith.constant 3.200000e+01 : f32
    %6 = vector.broadcast %cst_6 : f32 to vector<16x1xf32>
    %7 = arith.divf %5, %6 : vector<16x1xf32>
    %8 = vector.broadcast %7 : vector<16x1xf32> to vector<16x32xf32>
    %9 = arith.subf %1, %8 : vector<16x32xf32>
    %10 = arith.mulf %9, %9 : vector<16x32xf32>
    %cst_7 = arith.constant dense<0.000000e+00> : vector<16xf32>
    %11 = vector.multi_reduction <add>, %10, %cst_7 [1] : vector<16x32xf32> to vector<16xf32>
    %12 = vector.shape_cast %11 : vector<16xf32> to vector<16x1xf32>
    %cst_8 = arith.constant 3.200000e+01 : f32
    %13 = vector.broadcast %cst_8 : f32 to vector<16x1xf32>
    %14 = arith.divf %12, %13 : vector<16x1xf32>
    %cst_9 = arith.constant 9.99999974E-6 : f32
    %15 = vector.broadcast %cst_9 : f32 to vector<16x1xf32>
    %16 = arith.addf %14, %15 : vector<16x1xf32>
    %17 = math.rsqrt %16 : vector<16x1xf32>
    %18 = vector.broadcast %17 : vector<16x1xf32> to vector<16x32xf32>
    %19 = arith.mulf %9, %18 : vector<16x32xf32>
    %20 = vector.broadcast %2 : vector<1x32xf32> to vector<16x32xf32>
    %21 = arith.mulf %19, %20 : vector<16x32xf32>
    %22 = vector.broadcast %3 : vector<1x32xf32> to vector<16x32xf32>
    %23 = arith.addf %21, %22 : vector<16x32xf32>
    %c0_10 = arith.constant 0 : index
    %c0_11 = arith.constant 0 : index
    %24 = vector.load %arg4[%c0_10, %c0_11] : memref<32x96xf32, #tpu.memory_space<vmem>>, vector<32x96xf32>
    %cst_12 = arith.constant dense<0.000000e+00> : vector<16x96xf32>
    %25 = tpu.matmul %23, %24, %cst_12 {dimension_numbers = #tpu.dot_dimension_numbers<[1], [0], [0], [1], [0, 0, 1, 1], [], []>} : vector<16x32xf32>, vector<32x96xf32>, vector<16x96xf32> -> vector<16x96xf32>
    %c0_13 = arith.constant 0 : index
    %c0_14 = arith.constant 0 : index
    %26 = vector.load %arg5[%c0_13, %c0_14] : memref<1x96xf32, #tpu.memory_space<vmem>>, vector<1x96xf32>
    %27 = vector.broadcast %26 : vector<1x96xf32> to vector<16x96xf32>
    %28 = arith.addf %25, %27 : vector<16x96xf32>
    %29 = vector.extract_strided_slice %28 {offsets = [0, 0], sizes = [16, 32], strides = [1, 1]} : vector<16x96xf32> to vector<16x32xf32>
    %cst_15 = arith.constant 0.353553385 : f32
    %30 = vector.broadcast %cst_15 : f32 to vector<16x32xf32>
    %31 = arith.mulf %29, %30 : vector<16x32xf32>
    %32 = vector.extract_strided_slice %28 {offsets = [0, 32], sizes = [16, 32], strides = [1, 1]} : vector<16x96xf32> to vector<16x32xf32>
    %33 = vector.extract_strided_slice %28 {offsets = [0, 64], sizes = [16, 32], strides = [1, 1]} : vector<16x96xf32> to vector<16x32xf32>
    %34 = tpu.iota {dimensions = array<i32: 0>} : vector<16x16xi32>
    %35 = tpu.iota {dimensions = array<i32: 1>} : vector<16x16xi32>
    %36 = arith.cmpi sge, %34, %35 : vector<16x16xi32>
    %37 = vector.extract_strided_slice %31 {offsets = [0, 0], sizes = [16, 8], strides = [1, 1]} : vector<16x32xf32> to vector<16x8xf32>
    %38 = vector.extract_strided_slice %32 {offsets = [0, 0], sizes = [16, 8], strides = [1, 1]} : vector<16x32xf32> to vector<16x8xf32>
    %39 = vector.extract_strided_slice %33 {offsets = [0, 0], sizes = [16, 8], strides = [1, 1]} : vector<16x32xf32> to vector<16x8xf32>
    %cst_16 = arith.constant dense<0.000000e+00> : vector<16x16xf32>
    %40 = tpu.matmul %37, %38, %cst_16 {dimension_numbers = #tpu.dot_dimension_numbers<[1], [1], [0], [0], [0, 0, 1, 0], [], []>} : vector<16x8xf32>, vector<16x8xf32>, vector<16x16xf32> -> vector<16x16xf32>
    %cst_17 = arith.constant 0xFF800000 : f32
    %41 = vector.broadcast %cst_17 : f32 to vector<16x16xf32>
    %42 = arith.select %36, %40, %41 : vector<16x16xi1>, vector<16x16xf32>
    %cst_18 = arith.constant dense<0xFF800000> : vector<16xf32>
    %43 = vector.multi_reduction <maximumf>, %42, %cst_18 [1] : vector<16x16xf32> to vector<16xf32>
    %44 = vector.shape_cast %43 : vector<16xf32> to vector<16x1xf32>
    %45 = vector.broadcast %44 : vector<16x1xf32> to vector<16x16xf32>
    %46 = arith.subf %42, %45 : vector<16x16xf32>
    %47 = math.exp %46 : vector<16x16xf32>
    %cst_19 = arith.constant dense<0.000000e+00> : vector<16xf32>
    %48 = vector.multi_reduction <add>, %47, %cst_19 [1] : vector<16x16xf32> to vector<16xf32>
    %49 = vector.shape_cast %48 : vector<16xf32> to vector<16x1xf32>
    %50 = tpu.reciprocal %49 {approx = true} : vector<16x1xf32> -> vector<16x1xf32>
    %51 = vector.broadcast %50 : vector<16x1xf32> to vector<16x16xf32>
    %52 = arith.mulf %47, %51 : vector<16x16xf32>
    %cst_20 = arith.constant dense<0.000000e+00> : vector<16x8xf32>
    %53 = tpu.matmul %52, %39, %cst_20 {dimension_numbers = #tpu.dot_dimension_numbers<[1], [0], [0], [1], [0, 0, 1, 1], [], []>} : vector<16x16xf32>, vector<16x8xf32>, vector<16x8xf32> -> vector<16x8xf32>
    %54 = vector.extract_strided_slice %31 {offsets = [0, 8], sizes = [16, 8], strides = [1, 1]} : vector<16x32xf32> to vector<16x8xf32>
    %55 = vector.extract_strided_slice %32 {offsets = [0, 8], sizes = [16, 8], strides = [1, 1]} : vector<16x32xf32> to vector<16x8xf32>
    %56 = vector.extract_strided_slice %33 {offsets = [0, 8], sizes = [16, 8], strides = [1, 1]} : vector<16x32xf32> to vector<16x8xf32>
    %cst_21 = arith.constant dense<0.000000e+00> : vector<16x16xf32>
    %57 = tpu.matmul %54, %55, %cst_21 {dimension_numbers = #tpu.dot_dimension_numbers<[1], [1], [0], [0], [0, 0, 1, 0], [], []>} : vector<16x8xf32>, vector<16x8xf32>, vector<16x16xf32> -> vector<16x16xf32>
    %cst_22 = arith.constant 0xFF800000 : f32
    %58 = vector.broadcast %cst_22 : f32 to vector<16x16xf32>
    %59 = arith.select %36, %57, %58 : vector<16x16xi1>, vector<16x16xf32>
    %cst_23 = arith.constant dense<0xFF800000> : vector<16xf32>
    %60 = vector.multi_reduction <maximumf>, %59, %cst_23 [1] : vector<16x16xf32> to vector<16xf32>
    %61 = vector.shape_cast %60 : vector<16xf32> to vector<16x1xf32>
    %62 = vector.broadcast %61 : vector<16x1xf32> to vector<16x16xf32>
    %63 = arith.subf %59, %62 : vector<16x16xf32>
    %64 = math.exp %63 : vector<16x16xf32>
    %cst_24 = arith.constant dense<0.000000e+00> : vector<16xf32>
    %65 = vector.multi_reduction <add>, %64, %cst_24 [1] : vector<16x16xf32> to vector<16xf32>
    %66 = vector.shape_cast %65 : vector<16xf32> to vector<16x1xf32>
    %67 = tpu.reciprocal %66 {approx = true} : vector<16x1xf32> -> vector<16x1xf32>
    %68 = vector.broadcast %67 : vector<16x1xf32> to vector<16x16xf32>
    %69 = arith.mulf %64, %68 : vector<16x16xf32>
    %cst_25 = arith.constant dense<0.000000e+00> : vector<16x8xf32>
    %70 = tpu.matmul %69, %56, %cst_25 {dimension_numbers = #tpu.dot_dimension_numbers<[1], [0], [0], [1], [0, 0, 1, 1], [], []>} : vector<16x16xf32>, vector<16x8xf32>, vector<16x8xf32> -> vector<16x8xf32>
    %71 = vector.extract_strided_slice %31 {offsets = [0, 16], sizes = [16, 8], strides = [1, 1]} : vector<16x32xf32> to vector<16x8xf32>
    %72 = vector.extract_strided_slice %32 {offsets = [0, 16], sizes = [16, 8], strides = [1, 1]} : vector<16x32xf32> to vector<16x8xf32>
    %73 = vector.extract_strided_slice %33 {offsets = [0, 16], sizes = [16, 8], strides = [1, 1]} : vector<16x32xf32> to vector<16x8xf32>
    %cst_26 = arith.constant dense<0.000000e+00> : vector<16x16xf32>
    %74 = tpu.matmul %71, %72, %cst_26 {dimension_numbers = #tpu.dot_dimension_numbers<[1], [1], [0], [0], [0, 0, 1, 0], [], []>} : vector<16x8xf32>, vector<16x8xf32>, vector<16x16xf32> -> vector<16x16xf32>
    %cst_27 = arith.constant 0xFF800000 : f32
    %75 = vector.broadcast %cst_27 : f32 to vector<16x16xf32>
    %76 = arith.select %36, %74, %75 : vector<16x16xi1>, vector<16x16xf32>
    %cst_28 = arith.constant dense<0xFF800000> : vector<16xf32>
    %77 = vector.multi_reduction <maximumf>, %76, %cst_28 [1] : vector<16x16xf32> to vector<16xf32>
    %78 = vector.shape_cast %77 : vector<16xf32> to vector<16x1xf32>
    %79 = vector.broadcast %78 : vector<16x1xf32> to vector<16x16xf32>
    %80 = arith.subf %76, %79 : vector<16x16xf32>
    %81 = math.exp %80 : vector<16x16xf32>
    %cst_29 = arith.constant dense<0.000000e+00> : vector<16xf32>
    %82 = vector.multi_reduction <add>, %81, %cst_29 [1] : vector<16x16xf32> to vector<16xf32>
    %83 = vector.shape_cast %82 : vector<16xf32> to vector<16x1xf32>
    %84 = tpu.reciprocal %83 {approx = true} : vector<16x1xf32> -> vector<16x1xf32>
    %85 = vector.broadcast %84 : vector<16x1xf32> to vector<16x16xf32>
    %86 = arith.mulf %81, %85 : vector<16x16xf32>
    %cst_30 = arith.constant dense<0.000000e+00> : vector<16x8xf32>
    %87 = tpu.matmul %86, %73, %cst_30 {dimension_numbers = #tpu.dot_dimension_numbers<[1], [0], [0], [1], [0, 0, 1, 1], [], []>} : vector<16x16xf32>, vector<16x8xf32>, vector<16x8xf32> -> vector<16x8xf32>
    %88 = vector.extract_strided_slice %31 {offsets = [0, 24], sizes = [16, 8], strides = [1, 1]} : vector<16x32xf32> to vector<16x8xf32>
    %89 = vector.extract_strided_slice %32 {offsets = [0, 24], sizes = [16, 8], strides = [1, 1]} : vector<16x32xf32> to vector<16x8xf32>
    %90 = vector.extract_strided_slice %33 {offsets = [0, 24], sizes = [16, 8], strides = [1, 1]} : vector<16x32xf32> to vector<16x8xf32>
    %cst_31 = arith.constant dense<0.000000e+00> : vector<16x16xf32>
    %91 = tpu.matmul %88, %89, %cst_31 {dimension_numbers = #tpu.dot_dimension_numbers<[1], [1], [0], [0], [0, 0, 1, 0], [], []>} : vector<16x8xf32>, vector<16x8xf32>, vector<16x16xf32> -> vector<16x16xf32>
    %cst_32 = arith.constant 0xFF800000 : f32
    %92 = vector.broadcast %cst_32 : f32 to vector<16x16xf32>
    %93 = arith.select %36, %91, %92 : vector<16x16xi1>, vector<16x16xf32>
    %cst_33 = arith.constant dense<0xFF800000> : vector<16xf32>
    %94 = vector.multi_reduction <maximumf>, %93, %cst_33 [1] : vector<16x16xf32> to vector<16xf32>
    %95 = vector.shape_cast %94 : vector<16xf32> to vector<16x1xf32>
    %96 = vector.broadcast %95 : vector<16x1xf32> to vector<16x16xf32>
    %97 = arith.subf %93, %96 : vector<16x16xf32>
    %98 = math.exp %97 : vector<16x16xf32>
    %cst_34 = arith.constant dense<0.000000e+00> : vector<16xf32>
    %99 = vector.multi_reduction <add>, %98, %cst_34 [1] : vector<16x16xf32> to vector<16xf32>
    %100 = vector.shape_cast %99 : vector<16xf32> to vector<16x1xf32>
    %101 = tpu.reciprocal %100 {approx = true} : vector<16x1xf32> -> vector<16x1xf32>
    %102 = vector.broadcast %101 : vector<16x1xf32> to vector<16x16xf32>
    %103 = arith.mulf %98, %102 : vector<16x16xf32>
    %cst_35 = arith.constant dense<0.000000e+00> : vector<16x8xf32>
    %104 = tpu.matmul %103, %90, %cst_35 {dimension_numbers = #tpu.dot_dimension_numbers<[1], [0], [0], [1], [0, 0, 1, 1], [], []>} : vector<16x16xf32>, vector<16x8xf32>, vector<16x8xf32> -> vector<16x8xf32>
    %105 = tpu.concatenate %53, %70, %87, %104 in 1 : vector<16x8xf32>, vector<16x8xf32>, vector<16x8xf32>, vector<16x8xf32> -> vector<16x32xf32>
    %106 = arith.addf %1, %105 : vector<16x32xf32>
    %c0_36 = arith.constant 0 : index
    %c0_37 = arith.constant 0 : index
    %107 = vector.load %arg6[%c0_36, %c0_37] : memref<1x32xf32, #tpu.memory_space<vmem>>, vector<1x32xf32>
    %c0_38 = arith.constant 0 : index
    %c0_39 = arith.constant 0 : index
    %108 = vector.load %arg7[%c0_38, %c0_39] : memref<1x32xf32, #tpu.memory_space<vmem>>, vector<1x32xf32>
    %cst_40 = arith.constant dense<0.000000e+00> : vector<16xf32>
    %109 = vector.multi_reduction <add>, %106, %cst_40 [1] : vector<16x32xf32> to vector<16xf32>
    %110 = vector.shape_cast %109 : vector<16xf32> to vector<16x1xf32>
    %cst_41 = arith.constant 3.200000e+01 : f32
    %111 = vector.broadcast %cst_41 : f32 to vector<16x1xf32>
    %112 = arith.divf %110, %111 : vector<16x1xf32>
    %113 = vector.broadcast %112 : vector<16x1xf32> to vector<16x32xf32>
    %114 = arith.subf %106, %113 : vector<16x32xf32>
    %115 = arith.mulf %114, %114 : vector<16x32xf32>
    %cst_42 = arith.constant dense<0.000000e+00> : vector<16xf32>
    %116 = vector.multi_reduction <add>, %115, %cst_42 [1] : vector<16x32xf32> to vector<16xf32>
    %117 = vector.shape_cast %116 : vector<16xf32> to vector<16x1xf32>
    %cst_43 = arith.constant 3.200000e+01 : f32
    %118 = vector.broadcast %cst_43 : f32 to vector<16x1xf32>
    %119 = arith.divf %117, %118 : vector<16x1xf32>
    %cst_44 = arith.constant 9.99999974E-6 : f32
    %120 = vector.broadcast %cst_44 : f32 to vector<16x1xf32>
    %121 = arith.addf %119, %120 : vector<16x1xf32>
    %122 = math.rsqrt %121 : vector<16x1xf32>
    %123 = vector.broadcast %122 : vector<16x1xf32> to vector<16x32xf32>
    %124 = arith.mulf %114, %123 : vector<16x32xf32>
    %125 = vector.broadcast %107 : vector<1x32xf32> to vector<16x32xf32>
    %126 = arith.mulf %124, %125 : vector<16x32xf32>
    %127 = vector.broadcast %108 : vector<1x32xf32> to vector<16x32xf32>
    %128 = arith.addf %126, %127 : vector<16x32xf32>
    %c0_45 = arith.constant 0 : index
    %c0_46 = arith.constant 0 : index
    %129 = vector.load %arg8[%c0_45, %c0_46] : memref<32x128xf32, #tpu.memory_space<vmem>>, vector<32x128xf32>
    %cst_47 = arith.constant dense<0.000000e+00> : vector<16x128xf32>
    %130 = tpu.matmul %128, %129, %cst_47 {dimension_numbers = #tpu.dot_dimension_numbers<[1], [0], [0], [1], [0, 0, 1, 1], [], []>} : vector<16x32xf32>, vector<32x128xf32>, vector<16x128xf32> -> vector<16x128xf32>
    %c0_48 = arith.constant 0 : index
    %c0_49 = arith.constant 0 : index
    %131 = vector.load %arg9[%c0_48, %c0_49] : memref<1x128xf32, #tpu.memory_space<vmem>>, vector<1x128xf32>
    %132 = vector.broadcast %131 : vector<1x128xf32> to vector<16x128xf32>
    %133 = arith.addf %130, %132 : vector<16x128xf32>
    %134 = arith.mulf %133, %133 : vector<16x128xf32>
    %135 = arith.mulf %133, %134 : vector<16x128xf32>
    %cst_50 = arith.constant 4.471500e-02 : f32
    %136 = vector.broadcast %cst_50 : f32 to vector<16x128xf32>
    %137 = arith.mulf %136, %135 : vector<16x128xf32>
    %138 = arith.addf %133, %137 : vector<16x128xf32>
    %cst_51 = arith.constant 0.797884583 : f32
    %139 = vector.broadcast %cst_51 : f32 to vector<16x128xf32>
    %140 = arith.mulf %139, %138 : vector<16x128xf32>
    %141 = math.tanh %140 : vector<16x128xf32>
    %cst_52 = arith.constant 1.000000e+00 : f32
    %142 = vector.broadcast %cst_52 : f32 to vector<16x128xf32>
    %143 = arith.addf %142, %141 : vector<16x128xf32>
    %cst_53 = arith.constant 5.000000e-01 : f32
    %144 = vector.broadcast %cst_53 : f32 to vector<16x128xf32>
    %145 = arith.mulf %144, %143 : vector<16x128xf32>
    %146 = arith.mulf %133, %145 : vector<16x128xf32>
    %c0_54 = arith.constant 0 : index
    %c0_55 = arith.constant 0 : index
    %147 = vector.load %arg10[%c0_54, %c0_55] : memref<128x32xf32, #tpu.memory_space<vmem>>, vector<128x32xf32>
    %cst_56 = arith.constant dense<0.000000e+00> : vector<16x32xf32>
    %148 = tpu.matmul %146, %147, %cst_56 {dimension_numbers = #tpu.dot_dimension_numbers<[1], [0], [0], [1], [0, 0, 1, 1], [], []>} : vector<16x128xf32>, vector<128x32xf32>, vector<16x32xf32> -> vector<16x32xf32>
    %c0_57 = arith.constant 0 : index
    %c0_58 = arith.constant 0 : index
    %149 = vector.load %arg11[%c0_57, %c0_58] : memref<1x32xf32, #tpu.memory_space<vmem>>, vector<1x32xf32>
    %150 = vector.broadcast %149 : vector<1x32xf32> to vector<16x32xf32>
    %151 = arith.addf %148, %150 : vector<16x32xf32>
    %152 = arith.addf %106, %151 : vector<16x32xf32>
    %c0_59 = arith.constant 0 : index
    %c0_60 = arith.constant 0 : index
    %c0_61 = arith.constant 0 : index
    %153 = vector.load %arg12[%c0_59, %c0_60, %c0_61] : memref<1x16x32xf32, #tpu.memory_space<vmem>>, vector<1x16x32xf32>
    %154 = vector.shape_cast %153 : vector<1x16x32xf32> to vector<16x32xf32>
    %155 = vector.shape_cast %152 : vector<16x32xf32> to vector<1x16x32xf32>
    tpu.vector_store %arg12[%c0_59, %c0_60, %c0_61], %155 {strides = array<i32>} : memref<1x16x32xf32, #tpu.memory_space<vmem>>, vector<1x16x32xf32>,
    return
  }
  func.func @transform_0(%arg0: i32) -> (i32, i32, i32) {
    %c0_i32 = arith.constant 0 : i32
    %c0_i32_0 = arith.constant 0 : i32
    %c0_i32_1 = arith.constant 0 : i32
    return %arg0, %c0_i32, %c0_i32_0 : i32, i32, i32
  }
  func.func @transform_1(%arg0: i32) -> (i32, i32) {
    %c0_i32 = arith.constant 0 : i32
    %c0_i32_0 = arith.constant 0 : i32
    %c0_i32_1 = arith.constant 0 : i32
    return %c0_i32, %c0_i32_0 : i32, i32
  }
  func.func @transform_2(%arg0: i32) -> (i32, i32) {
    %c0_i32 = arith.constant 0 : i32
    %c0_i32_0 = arith.constant 0 : i32
    %c0_i32_1 = arith.constant 0 : i32
    return %c0_i32, %c0_i32_0 : i32, i32
  }
  func.func @transform_3(%arg0: i32) -> (i32, i32) {
    %c0_i32 = arith.constant 0 : i32
    %c0_i32_0 = arith.constant 0 : i32
    %c0_i32_1 = arith.constant 0 : i32
    return %c0_i32, %c0_i32_0 : i32, i32
  }
  func.func @transform_4(%arg0: i32) -> (i32, i32) {
    %c0_i32 = arith.constant 0 : i32
    %c0_i32_0 = arith.constant 0 : i32
    %c0_i32_1 = arith.constant 0 : i32
    return %c0_i32, %c0_i32_0 : i32, i32
  }
  func.func @transform_5(%arg0: i32) -> (i32, i32) {
    %c0_i32 = arith.constant 0 : i32
    %c0_i32_0 = arith.constant 0 : i32
    %c0_i32_1 = arith.constant 0 : i32
    return %c0_i32, %c0_i32_0 : i32, i32
  }
  func.func @transform_6(%arg0: i32) -> (i32, i32) {
    %c0_i32 = arith.constant 0 : i32
    %c0_i32_0 = arith.constant 0 : i32
    %c0_i32_1 = arith.constant 0 : i32
    return %c0_i32, %c0_i32_0 : i32, i32
  }
  func.func @transform_7(%arg0: i32) -> (i32, i32) {
    %c0_i32 = arith.constant 0 : i32
    %c0_i32_0 = arith.constant 0 : i32
    %c0_i32_1 = arith.constant 0 : i32
    return %c0_i32, %c0_i32_0 : i32, i32
  }
  func.func @transform_8(%arg0: i32) -> (i32, i32) {
    %c0_i32 = arith.constant 0 : i32
    %c0_i32_0 = arith.constant 0 : i32
    %c0_i32_1 = arith.constant 0 : i32
    return %c0_i32, %c0_i32_0 : i32, i32
  }
  func.func @transform_9(%arg0: i32) -> (i32, i32) {
    %c0_i32 = arith.constant 0 : i32
    %c0_i32_0 = arith.constant 0 : i32
    %c0_i32_1 = arith.constant 0 : i32
    return %c0_i32, %c0_i32_0 : i32, i32
  }
  func.func @transform_10(%arg0: i32) -> (i32, i32) {
    %c0_i32 = arith.constant 0 : i32
    %c0_i32_0 = arith.constant 0 : i32
    %c0_i32_1 = arith.constant 0 : i32
    return %c0_i32, %c0_i32_0 : i32, i32
  }
  func.func @transform_11(%arg0: i32) -> (i32, i32, i32) {
    %c0_i32 = arith.constant 0 : i32
    %c0_i32_0 = arith.constant 0 : i32
    %c0_i32_1 = arith.constant 0 : i32
    return %arg0, %c0_i32, %c0_i32_0 : i32, i32, i32
  }
}

</mosaic_0001>

<llo_original>
// kernel: tpu_custom_call.1
$region0: #{tpu_custom_call.1}
  #allocation0 [shape = 'u32[]', space=smem, size = 0x4, offset = 0x4, fixed_abs, tag = 'smem constant byte address 0x4 - core index']
  #allocation1 [shape = 'u32[72,128]{1,0:T(1,128)}', space=vmem, size = 0x9000, scoped, tag = 'internal scratch']
  %s0 = inlined_call_operand.vmem [shape: f32[2,16,32], index: 0, kind: input, shape index: {}]
  %s1 = inlined_call_operand.vmem [shape: f32[1,32], index: 1, kind: input, shape index: {}]
  %s2 = inlined_call_operand.vmem [shape: f32[1,32], index: 2, kind: input, shape index: {}]
  %s3 = inlined_call_operand.vmem [shape: f32[32,96], index: 3, kind: input, shape index: {}]
  %s4 = inlined_call_operand.vmem [shape: f32[1,96], index: 4, kind: input, shape index: {}]
  %s5 = inlined_call_operand.vmem [shape: f32[1,32], index: 5, kind: input, shape index: {}]
  %s6 = inlined_call_operand.vmem [shape: f32[1,32], index: 6, kind: input, shape index: {}]
  %s7 = inlined_call_operand.vmem [shape: f32[32,128], index: 7, kind: input, shape index: {}]
  %s8 = inlined_call_operand.vmem [shape: f32[1,128], index: 8, kind: input, shape index: {}]
  %s9 = inlined_call_operand.vmem [shape: f32[128,32], index: 9, kind: input, shape index: {}]
  %s10 = inlined_call_operand.vmem [shape: f32[1,32], index: 10, kind: input, shape index: {}]
  %s11 = inlined_call_operand.hbm [shape: f32[2,16,32], index: 11, kind: output, shape index: {}]
  %s12 = sld [smem:[#allocation0]]
  $region77: #{tpu_custom_call.1} parent=0
    _
  %s14 = ssub.s32 1, %s12
  %s15 = scalar_select 0, %s14, %s12
  $region1: #{tpu_custom_call.1} parent=0
    #allocation2 [shape = 'u8[16384]{0}', space=vmem, size = 0x4000, scoped, tag = 'output window, operand 0']
    #allocation3 [shape = 's32[2]{0}', space=sflag, size = 0x8, scoped, tag = 'scoped memory for tpu_custom_call.1']
    %16 = vsyncpa [#allocation3], 0
    %s17 = scalar_lea.sflag [#allocation3], 1
    %18 = vsyncpa %s17, 0
    loop: start=0, step=1, limit=4
    $region2: #{tpu_custom_call.1} parent=1 // loop_pre_header
      _
    $region3: #{tpu_custom_call.1} parent=1 // loop_header
      %s20 = sphi 0, %s24
      %p21 = scmp.ge.s32.totalorder %s20, 4
      %s30 = sphi 0, %s32
      %s33 = sphi 0, %s30
      %s34 = sphi 0, %s33
      %s50 = sphi 0, %s34
      %s54 = sphi 0, %s54
      %s56 = sphi 0, %s54
      %s57 = sphi 0, %s56
      %s71 = sphi 0, %s57
      %s75 = sphi 0, %s75
      %s77 = sphi 0, %s75
      %s78 = sphi 0, %s77
      %s92 = sphi 0, %s78
      %s96 = sphi 0, %s96
      %s98 = sphi 0, %s96
      %s99 = sphi 0, %s98
      %s113 = sphi 0, %s99
      %s117 = sphi 0, %s117
      %s119 = sphi 0, %s117
      %s120 = sphi 0, %s119
      %s134 = sphi 0, %s120
      %s138 = sphi 0, %s138
      %s140 = sphi 0, %s138
      %s141 = sphi 0, %s140
      %s155 = sphi 0, %s141
      %s159 = sphi 0, %s159
      %s161 = sphi 0, %s159
      %s162 = sphi 0, %s161
      %s176 = sphi 0, %s162
      %s180 = sphi 0, %s180
      %s182 = sphi 0, %s180
      %s183 = sphi 0, %s182
      %s197 = sphi 0, %s183
      %s201 = sphi 0, %s201
      %s203 = sphi 0, %s201
      %s204 = sphi 0, %s203
      %s218 = sphi 0, %s204
      %s222 = sphi 0, %s222
      %s224 = sphi 0, %s222
      %s225 = sphi 0, %s224
      %s239 = sphi 0, %s225
      %s243 = sphi 0, %s243
      %s245 = sphi 0, %s243
      %s246 = sphi 0, %s245
      %s260 = sphi 0, %s246
      %s266 = sphi 0, %s268
      %s269 = sphi 0, %s266
      %s270 = sphi 0, %s269
      %s286 = sphi 0, %s270
    $region4: #{tpu_custom_call.1} parent=1 // loop_header_branch
      %23 = sbr.rel (%p21) target = $region8
    $region5: #{tpu_custom_call.1} parent=1 // loop_body
      %s25 = ssub.s32 %s20, 1
      %s26 = ssub.s32 %s20, 2
      %s27 = sadd.s32 %s20, 1
      %s28 = ssub.s32 %s20, %s27
      %p29 = scmp.eq.s32.totalorder %s28, 0
      %s31 = sadd.s32 %s30, 1
      %s32 = scalar_select %p29, %s30, %s31
      %p35 = pneg %p29
      %p36 = scmp.eq.s32.totalorder %s20, 1
      %p37 = por %p35, %p36
      %p38 = scmp.ne.s32.totalorder %s30, %s33
      %p39 = scmp.eq.s32.totalorder %s20, 0
      %p40 = por %p38, %p39
      %p41 = scmp.ne.s32.totalorder %s30, %s33
      %p42 = scmp.eq.s32.totalorder %s25, 1
      %p43 = por %p41, %p42
      %p44 = scmp.ne.s32.totalorder %s33, %s34
      %p45 = scmp.eq.s32.totalorder %s25, 0
      %p46 = por %p44, %p45
      %p47 = scmp.ne.s32.totalorder %s33, %s34
      %p48 = scmp.eq.s32.totalorder %s26, 1
      %p49 = por %p47, %p48
      %p51 = scmp.ne.s32.totalorder %s34, %s50
      %p52 = scmp.eq.s32.totalorder %s26, 0
      %p53 = por %p51, %p52
      %s55 = sadd.s32 %s54, 1
      %p58 = scmp.eq.s32.totalorder %s20, 1
      %p59 = scmp.ne.s32.totalorder %s54, %s56
      %p60 = scmp.eq.s32.totalorder %s20, 0
      %p61 = por %p59, %p60
      %p62 = scmp.ne.s32.totalorder %s54, %s56
      %p63 = scmp.eq.s32.totalorder %s25, 1
      %p64 = por %p62, %p63
      %p65 = scmp.ne.s32.totalorder %s56, %s57
      %p66 = scmp.eq.s32.totalorder %s25, 0
      %p67 = por %p65, %p66
      %p68 = scmp.ne.s32.totalorder %s56, %s57
      %p69 = scmp.eq.s32.totalorder %s26, 1
      %p70 = por %p68, %p69
      %p72 = scmp.ne.s32.totalorder %s57, %s71
      %p73 = scmp.eq.s32.totalorder %s26, 0
      %p74 = por %p72, %p73
      %s76 = sadd.s32 %s75, 1
      %p79 = scmp.eq.s32.totalorder %s20, 1
      %p80 = scmp.ne.s32.totalorder %s75, %s77
      %p81 = scmp.eq.s32.totalorder %s20, 0
      %p82 = por %p80, %p81
      %p83 = scmp.ne.s32.totalorder %s75, %s77
      %p84 = scmp.eq.s32.totalorder %s25, 1
      %p85 = por %p83, %p84
      %p86 = scmp.ne.s32.totalorder %s77, %s78
      %p87 = scmp.eq.s32.totalorder %s25, 0
      %p88 = por %p86, %p87
      %p89 = scmp.ne.s32.totalorder %s77, %s78
      %p90 = scmp.eq.s32.totalorder %s26, 1
      %p91 = por %p89, %p90
      %p93 = scmp.ne.s32.totalorder %s78, %s92
      %p94 = scmp.eq.s32.totalorder %s26, 0
      %p95 = por %p93, %p94
      %s97 = sadd.s32 %s96, 1
      %p100 = scmp.eq.s32.totalorder %s20, 1
      %p101 = scmp.ne.s32.totalorder %s96, %s98
      %p102 = scmp.eq.s32.totalorder %s20, 0
      %p103 = por %p101, %p102
      %p104 = scmp.ne.s32.totalorder %s96, %s98
      %p105 = scmp.eq.s32.totalorder %s25, 1
      %p106 = por %p104, %p105
      %p107 = scmp.ne.s32.totalorder %s98, %s99
      %p108 = scmp.eq.s32.totalorder %s25, 0
      %p109 = por %p107, %p108
      %p110 = scmp.ne.s32.totalorder %s98, %s99
      %p111 = scmp.eq.s32.totalorder %s26, 1
      %p112 = por %p110, %p111
      %p114 = scmp.ne.s32.totalorder %s99, %s113
      %p115 = scmp.eq.s32.totalorder %s26, 0
      %p116 = por %p114, %p115
      %s118 = sadd.s32 %s117, 1
      %p121 = scmp.eq.s32.totalorder %s20, 1
      %p122 = scmp.ne.s32.totalorder %s117, %s119
      %p123 = scmp.eq.s32.totalorder %s20, 0
      %p124 = por %p122, %p123
      %p125 = scmp.ne.s32.totalorder %s117, %s119
      %p126 = scmp.eq.s32.totalorder %s25, 1
      %p127 = por %p125, %p126
      %p128 = scmp.ne.s32.totalorder %s119, %s120
      %p129 = scmp.eq.s32.totalorder %s25, 0
      %p130 = por %p128, %p129
      %p131 = scmp.ne.s32.totalorder %s119, %s120
      %p132 = scmp.eq.s32.totalorder %s26, 1
      %p133 = por %p131, %p132
      %p135 = scmp.ne.s32.totalorder %s120, %s134
      %p136 = scmp.eq.s32.totalorder %s26, 0
      %p137 = por %p135, %p136
      %s139 = sadd.s32 %s138, 1
      %p142 = scmp.eq.s32.totalorder %s20, 1
      %p143 = scmp.ne.s32.totalorder %s138, %s140
      %p144 = scmp.eq.s32.totalorder %s20, 0
      %p145 = por %p143, %p144
      %p146 = scmp.ne.s32.totalorder %s138, %s140
      %p147 = scmp.eq.s32.totalorder %s25, 1
      %p148 = por %p146, %p147
      %p149 = scmp.ne.s32.totalorder %s140, %s141
      %p150 = scmp.eq.s32.totalorder %s25, 0
      %p151 = por %p149, %p150
      %p152 = scmp.ne.s32.totalorder %s140, %s141
      %p153 = scmp.eq.s32.totalorder %s26, 1
      %p154 = por %p152, %p153
      %p156 = scmp.ne.s32.totalorder %s141, %s155
      %p157 = scmp.eq.s32.totalorder %s26, 0
      %p158 = por %p156, %p157
      %s160 = sadd.s32 %s159, 1
      %p163 = scmp.eq.s32.totalorder %s20, 1
      %p164 = scmp.ne.s32.totalorder %s159, %s161
      %p165 = scmp.eq.s32.totalorder %s20, 0
      %p166 = por %p164, %p165
      %p167 = scmp.ne.s32.totalorder %s159, %s161
      %p168 = scmp.eq.s32.totalorder %s25, 1
      %p169 = por %p167, %p168
      %p170 = scmp.ne.s32.totalorder %s161, %s162
      %p171 = scmp.eq.s32.totalorder %s25, 0
      %p172 = por %p170, %p171
      %p173 = scmp.ne.s32.totalorder %s161, %s162
      %p174 = scmp.eq.s32.totalorder %s26, 1
      %p175 = por %p173, %p174
      %p177 = scmp.ne.s32.totalorder %s162, %s176
      %p178 = scmp.eq.s32.totalorder %s26, 0
      %p179 = por %p177, %p178
      %s181 = sadd.s32 %s180, 1
      %p184 = scmp.eq.s32.totalorder %s20, 1
      %p185 = scmp.ne.s32.totalorder %s180, %s182
      %p186 = scmp.eq.s32.totalorder %s20, 0
      %p187 = por %p185, %p186
      %p188 = scmp.ne.s32.totalorder %s180, %s182
      %p189 = scmp.eq.s32.totalorder %s25, 1
      %p190 = por %p188, %p189
      %p191 = scmp.ne.s32.totalorder %s182, %s183
      %p192 = scmp.eq.s32.totalorder %s25, 0
      %p193 = por %p191, %p192
      %p194 = scmp.ne.s32.totalorder %s182, %s183
      %p195 = scmp.eq.s32.totalorder %s26, 1
      %p196 = por %p194, %p195
      %p198 = scmp.ne.s32.totalorder %s183, %s197
      %p199 = scmp.eq.s32.totalorder %s26, 0
      %p200 = por %p198, %p199
      %s202 = sadd.s32 %s201, 1
      %p205 = scmp.eq.s32.totalorder %s20, 1
      %p206 = scmp.ne.s32.totalorder %s201, %s203
      %p207 = scmp.eq.s32.totalorder %s20, 0
      %p208 = por %p206, %p207
      %p209 = scmp.ne.s32.totalorder %s201, %s203
      %p210 = scmp.eq.s32.totalorder %s25, 1
      %p211 = por %p209, %p210
      %p212 = scmp.ne.s32.totalorder %s203, %s204
      %p213 = scmp.eq.s32.totalorder %s25, 0
      %p214 = por %p212, %p213
      %p215 = scmp.ne.s32.totalorder %s203, %s204
      %p216 = scmp.eq.s32.totalorder %s26, 1
      %p217 = por %p215, %p216
      %p219 = scmp.ne.s32.totalorder %s204, %s218
      %p220 = scmp.eq.s32.totalorder %s26, 0
      %p221 = por %p219, %p220
      %s223 = sadd.s32 %s222, 1
      %p226 = scmp.eq.s32.totalorder %s20, 1
      %p227 = scmp.ne.s32.totalorder %s222, %s224
      %p228 = scmp.eq.s32.totalorder %s20, 0
      %p229 = por %p227, %p228
      %p230 = scmp.ne.s32.totalorder %s222, %s224
      %p231 = scmp.eq.s32.totalorder %s25, 1
      %p232 = por %p230, %p231
      %p233 = scmp.ne.s32.totalorder %s224, %s225
      %p234 = scmp.eq.s32.totalorder %s25, 0
      %p235 = por %p233, %p234
      %p236 = scmp.ne.s32.totalorder %s224, %s225
      %p237 = scmp.eq.s32.totalorder %s26, 1
      %p238 = por %p236, %p237
      %p240 = scmp.ne.s32.totalorder %s225, %s239
      %p241 = scmp.eq.s32.totalorder %s26, 0
      %p242 = por %p240, %p241
      %s244 = sadd.s32 %s243, 1
      %p247 = scmp.eq.s32.totalorder %s20, 1
      %p248 = scmp.ne.s32.totalorder %s243, %s245
      %p249 = scmp.eq.s32.totalorder %s20, 0
      %p250 = por %p248, %p249
      %p251 = scmp.ne.s32.totalorder %s243, %s245
      %p252 = scmp.eq.s32.totalorder %s25, 1
      %p253 = por %p251, %p252
      %p254 = scmp.ne.s32.totalorder %s245, %s246
      %p255 = scmp.eq.s32.totalorder %s25, 0
      %p256 = por %p254, %p255
      %p257 = scmp.ne.s32.totalorder %s245, %s246
      %p258 = scmp.eq.s32.totalorder %s26, 1
      %p259 = por %p257, %p258
      %p261 = scmp.ne.s32.totalorder %s246, %s260
      %p262 = scmp.eq.s32.totalorder %s26, 0
      %p263 = por %p261, %p262
      %s264 = ssub.s32 %s20, %s27
      %p265 = scmp.eq.s32.totalorder %s264, 0
      %s267 = sadd.s32 %s266, 1
      %s268 = scalar_select %p265, %s266, %s267
      %p271 = pneg %p265
      %p272 = scmp.eq.s32.totalorder %s20, 1
      %p273 = por %p271, %p272
      %p274 = scmp.ne.s32.totalorder %s266, %s269
      %p275 = scmp.eq.s32.totalorder %s20, 0
      %p276 = por %p274, %p275
      %p277 = scmp.ne.s32.totalorder %s266, %s269
      %p278 = scmp.eq.s32.totalorder %s25, 1
      %p279 = por %p277, %p278
      %p280 = scmp.ne.s32.totalorder %s269, %s270
      %p281 = scmp.eq.s32.totalorder %s25, 0
      %p282 = por %p280, %p281
      %p283 = scmp.ne.s32.totalorder %s269, %s270
      %p284 = scmp.eq.s32.totalorder %s26, 1
      %p285 = por %p283, %p284
      %p287 = scmp.ne.s32.totalorder %s270, %s286
      %p288 = scmp.eq.s32.totalorder %s26, 0
      %p289 = por %p287, %p288
      %p290 = scmp.le.s32.totalorder 1, %s20
      %p291 = scmp.lt.s32.totalorder %s20, 3
      %p292 = pnand %p290, %p291
      %p293 = pneg %p292
      // Predicated region
      $region9: #{tpu_custom_call.1} parent=5 // pred_check
        _
      $region10: #{tpu_custom_call.1} parent=5 // pred_check_branch
        %295 = sbr.rel (%p292) target = $region12
      $region11: #{tpu_custom_call.1} parent=5 // pred_region
        %s296 = ssub.s32 %s20, 1
        // Predicated region
        $region13: #{tpu_custom_call.1} parent=11 // pred_check
          %p297 = pneg %p67
        $region14: #{tpu_custom_call.1} parent=11 // pred_check_branch
          %299 = sbr.rel (%p297) target = $region16
        $region15: #{tpu_custom_call.1} parent=11 // pred_region
          _
        $region16: #{tpu_custom_call.1} parent=11 // pred_fallthru
          _
        // Predicated region
        $region17: #{tpu_custom_call.1} parent=11 // pred_check
          %p300 = pneg %p88
        $region18: #{tpu_custom_call.1} parent=11 // pred_check_branch
          %302 = sbr.rel (%p300) target = $region20
        $region19: #{tpu_custom_call.1} parent=11 // pred_region
          _
        $region20: #{tpu_custom_call.1} parent=11 // pred_fallthru
          _
        // Predicated region
        $region21: #{tpu_custom_call.1} parent=11 // pred_check
          %p303 = pneg %p109
        $region22: #{tpu_custom_call.1} parent=11 // pred_check_branch
          %305 = sbr.rel (%p303) target = $region24
        $region23: #{tpu_custom_call.1} parent=11 // pred_region
          _
        $region24: #{tpu_custom_call.1} parent=11 // pred_fallthru
          _
        // Predicated region
        $region25: #{tpu_custom_call.1} parent=11 // pred_check
          %p306 = pneg %p130
        $region26: #{tpu_custom_call.1} parent=11 // pred_check_branch
          %308 = sbr.rel (%p306) target = $region28
        $region27: #{tpu_custom_call.1} parent=11 // pred_region
          _
        $region28: #{tpu_custom_call.1} parent=11 // pred_fallthru
          _
        // Predicated region
        $region29: #{tpu_custom_call.1} parent=11 // pred_check
          %p309 = pneg %p151
        $region30: #{tpu_custom_call.1} parent=11 // pred_check_branch
          %311 = sbr.rel (%p309) target = $region32
        $region31: #{tpu_custom_call.1} parent=11 // pred_region
          _
        $region32: #{tpu_custom_call.1} parent=11 // pred_fallthru
          _
        // Predicated region
        $region33: #{tpu_custom_call.1} parent=11 // pred_check
          %p312 = pneg %p172
        $region34: #{tpu_custom_call.1} parent=11 // pred_check_branch
          %314 = sbr.rel (%p312) target = $region36
        $region35: #{tpu_custom_call.1} parent=11 // pred_region
          _
        $region36: #{tpu_custom_call.1} parent=11 // pred_fallthru
          _
        // Predicated region
        $region37: #{tpu_custom_call.1} parent=11 // pred_check
          %p315 = pneg %p193
        $region38: #{tpu_custom_call.1} parent=11 // pred_check_branch
          %317 = sbr.rel (%p315) target = $region40
        $region39: #{tpu_custom_call.1} parent=11 // pred_region
          _
        $region40: #{tpu_custom_call.1} parent=11 // pred_fallthru
          _
        // Predicated region
        $region41: #{tpu_custom_call.1} parent=11 // pred_check
          %p318 = pneg %p214
        $region42: #{tpu_custom_call.1} parent=11 // pred_check_branch
          %320 = sbr.rel (%p318) target = $region44
        $region43: #{tpu_custom_call.1} parent=11 // pred_region
          _
        $region44: #{tpu_custom_call.1} parent=11 // pred_fallthru
          _
        // Predicated region
        $region45: #{tpu_custom_call.1} parent=11 // pred_check
          %p321 = pneg %p235
        $region46: #{tpu_custom_call.1} parent=11 // pred_check_branch
          %323 = sbr.rel (%p321) target = $region48
        $region47: #{tpu_custom_call.1} parent=11 // pred_region
          _
        $region48: #{tpu_custom_call.1} parent=11 // pred_fallthru
          _
        // Predicated region
        $region49: #{tpu_custom_call.1} parent=11 // pred_check
          %p324 = pneg %p256
        $region50: #{tpu_custom_call.1} parent=11 // pred_check_branch
          %326 = sbr.rel (%p324) target = $region52
        $region51: #{tpu_custom_call.1} parent=11 // pred_region
          _
        $region52: #{tpu_custom_call.1} parent=11 // pred_fallthru
          _
      $region12: #{tpu_custom_call.1} parent=5 // pred_fallthru
        _
      %p327 = scmp.lt.s32.totalorder %s20, 2
      // Predicated region
      $region53: #{tpu_custom_call.1} parent=5 // pred_check
        %p328 = pneg %p327
      $region54: #{tpu_custom_call.1} parent=5 // pred_check_branch
        %330 = sbr.rel (%p328) target = $region56
      $region55: #{tpu_custom_call.1} parent=5 // pred_region
        // Predicated region
        $region57: #{tpu_custom_call.1} parent=55 // pred_check
          %p331 = pneg %p40
        $region58: #{tpu_custom_call.1} parent=55 // pred_check_branch
          %333 = sbr.rel (%p331) target = $region60
        $region59: #{tpu_custom_call.1} parent=55 // pred_region
          %p334 = scmp.lt.s32.totalorder %s20, 1
          %s335 = scalar_select %p334, %s20, 1
          %s336 = smul.addr %s335, 2
          %s337 = smul.addr %s336, 8
          %s338 = scalar_lea.vmem %s0, %s337
        $region60: #{tpu_custom_call.1} parent=55 // pred_fallthru
          _
      $region56: #{tpu_custom_call.1} parent=5 // pred_fallthru
        _
      %p339 = scmp.le.s32.totalorder 1, %s20
      %p340 = scmp.lt.s32.totalorder %s20, 3
      %p341 = pnand %p339, %p340
      %p342 = pneg %p341
      // Predicated region
      $region61: #{tpu_custom_call.1} parent=5 // pred_check
        _
      $region62: #{tpu_custom_call.1} parent=5 // pred_check_branch
        %344 = sbr.rel (%p341) target = $region64
      $region63: #{tpu_custom_call.1} parent=5 // pred_region
        %s345 = ssub.s32 %s20, 1
        %p346 = scmp.lt.s32.totalorder %s25, 1
        %s347 = scalar_select %p346, %s25, 1
        %s348 = smul.addr %s347, 2
        %s349 = smul.addr %s348, 8
        %s350 = scalar_lea.vmem %s0, %s349
        %p351 = pneg %p46
        %p352 = pneg %p43
        %p353 = pneg %p67
        %p354 = pneg %p64
        %p355 = pneg %p88
        %p356 = pneg %p85
        %p357 = pneg %p109
        %p358 = pneg %p106
        %p359 = pneg %p130
        %p360 = pneg %p127
        %p361 = pneg %p151
        %p362 = pneg %p148
        %p363 = pneg %p172
        %p364 = pneg %p169
        %p365 = pneg %p193
        %p366 = pneg %p190
        %p367 = pneg %p214
        %p368 = pneg %p211
        %p369 = pneg %p235
        %p370 = pneg %p232
        %p371 = pneg %p256
        %p372 = pneg %p253
        %p373 = pneg %p282
        %p374 = pneg %p279
        %s375 = sand.u32 %s269, 1
        %s376 = scalar_lea.sflag [#allocation3], %s375
        %s377 = sand.u32 %s269, 1
        %s378 = smul.addr %s377, 16
        %s379 = scalar_lea.vmem [#allocation2], %s378
        %p380 = scmp.lt.s32.totalorder %s25, 1
        %s381 = scalar_select %p380, %s25, 1
        %s382 = smul.addr %s381, 2
        %s383 = smul.addr %s382, 8
        %s384 = scalar_lea.vmem %s0, %s383
        %v385 = vld [vmem:[%s384] sm:$0xff]
        %v386 = vld [vmem:[%s384 + $0x8] sm:$0xff]
        %v387 = vld [vmem:[%s1] sm:$0x1]
        %v388 = vld [vmem:[%s2] sm:$0x1]
        %vm389 = vcmask 261120
        %v390 = vsel %vm389, %v385, 0.0
        %391 = vadd.xlane.f32.xlu0 %v390
        %v392 = vpop.xlane.xlu0 %391
        %v393 = vsel %vm389, %v386, 0.0
        %394 = vadd.xlane.f32.xlu0 %v393
        %v395 = vpop.xlane.xlu0 %394
        %v396 = vrcp.pop 32.0
        %v397 = vmul.f32 32.0, %v396
        %v398 = vsub.f32 1.0, %v397
        %v399 = vmul.f32 %v396, %v398
        %v400 = vadd.f32 %v396, %v399
        %vm401 = vweird.f32 %v396
        %v402 = vsel %vm401, %v396, %v400
        %v403 = vmul.f32 %v392, %v402
        %v404 = vmul.f32 %v395, %v402
        %v405 = vsub.f32 %v385, %v403
        %v406 = vsub.f32 %v386, %v404
        %v407 = vmul.f32 %v405, %v405
        %v408 = vmul.f32 %v406, %v406
        %v409 = vsel %vm389, %v407, 0.0
        %410 = vadd.xlane.f32.xlu0 %v409
        %v411 = vpop.xlane.xlu0 %410
        %v412 = vsel %vm389, %v408, 0.0
        %413 = vadd.xlane.f32.xlu0 %v412
        %v414 = vpop.xlane.xlu0 %413
        %v415 = vmul.f32 %v411, %v402
        %v416 = vmul.f32 %v414, %v402
        %v417 = vadd.f32 %v415, 1e-05
        %v418 = vadd.f32 %v416, 1e-05
        %v419 = vrsqrt.pop %v417
        %v420 = vmul.f32 %v419, %v417
        %v421 = vmul.f32 %v420, %v419
        %v422 = vmul.f32 0.5, %v421
        %v423 = vsub.f32 1.5, %v422
        %v424 = vmul.f32 %v419, %v423
        %vm425 = vweird.f32 %v417
        %vm426 = vweird.f32 %v419
        %vm427 = vmor %vm425, %vm426
        %v428 = vsel %vm427, %v419, %v424
        %v429 = vrsqrt.pop %v418
        %v430 = vmul.f32 %v429, %v418
        %v431 = vmul.f32 %v430, %v429
        %v432 = vmul.f32 0.5, %v431
        %v433 = vsub.f32 1.5, %v432
        %v434 = vmul.f32 %v429, %v433
        %vm435 = vweird.f32 %v418
        %vm436 = vweird.f32 %v429
        %vm437 = vmor %vm435, %vm436
        %v438 = vsel %vm437, %v429, %v434
        %v439 = vmul.f32 %v405, %v428
        %v440 = vmul.f32 %v406, %v438
        %v442 = vperm.slane %v387, 0
        %v444 = vmul.f32 %v439, %v442
        %v445 = vmul.f32 %v440, %v442
        %v447 = vperm.slane %v388, 0
        %v449 = vadd.f32 %v444, %v447
        %v450 = vadd.f32 %v445, %v447
        %v451 = vld [vmem:[%s3] sm:$0xff]
        %v452 = vld [vmem:[%s3 + $0x8] sm:$0xff]
        %v453 = vld [vmem:[%s3 + $0x10] sm:$0xff]
        %v454 = vld [vmem:[%s3 + $0x18] sm:$0xff]
        %v455 = vld [vmem:[%s4] sm:$0x1]
        %v457 = vperm.slane %v455, 0
        %v460 = vsel %vm389, %v449, 0
        %v463 = vsel %vm389, %v450, 0
        %465 = vmatpush.msra.mxu0 0.0
        %466 = vmatpush.msra.mxu0 0.0
        %467 = vmatpush.msra.mxu0 0.0
        %468 = vmatpush.msra.mxu0 0.0
        %469 = vmatpush.msra.mxu0 0.0
        %470 = vmatpush.msra.mxu0 0.0
        %471 = vmatpush.msra.mxu0 0.0
        %472 = vmatpush.msra.mxu0 0.0
        %473 = vmatpush.msra.mxu0 0.0
        %474 = vmatpush.msra.mxu0 0.0
        %475 = vmatpush.msra.mxu0 0.0
        %476 = vmatpush.msra.mxu0 0.0
        %477 = vmatpush.msra.mxu0 %v454
        %478 = vmatpush.msra.mxu0 %v453
        %479 = vmatpush.msra.mxu0 %v452
        %480 = vmatpush.msra.mxu0 %v451
        %481 = vmatmul.f32.gmra.mxu0 %v460
        %v482 = vpop.f32.mrf.mxu0
        %v483 = vadd.f32 %v457, %v482
        %484 = vmatmul.f32.gmra.mxu0 %v463
        %v485 = vpop.f32.mrf.mxu0
        %v486 = vadd.f32 %v457, %v485
        %487 = vdwg.mxu0
        %v488 = vmul.f32 %v483, 0.35355338
        %v489 = vmul.f32 %v486, 0.35355338
        %v490 = vlaneseq
        %v491 = vshrl.u32 %v490, 7
        %v492 = vadd.s32 %v491, 8
        %v493 = vlaneseq
        %v494 = vand.u32 %v493, 127
        %vm495 = vcmp.ge.s32.totalorder %v491, %v494
        %vm496 = vcmp.ge.s32.totalorder %v492, %v494
        %499 = vrot.lane.b32.xlu0 %v483, 96
        %v500 = vpop.permute.xlu0 %499
        %501 = vrot.lane.b32.xlu0 %v486, 96
        %v502 = vpop.permute.xlu0 %501
        %vm503 = vcmask 64512
        %v505 = vsel %vm503, %v488, 0
        %v508 = vsel %vm503, %v489, 0
        %v510 = vsel %vm503, %v500, 0
        %v512 = vsel %vm503, %v502, 0
        %514 = vmatpush.xpose.msra.mxu0 0.0
        %515 = vmatpush.xpose.msra.mxu0 0.0
        %516 = vmatpush.xpose.msra.mxu0 0.0
        %517 = vmatpush.xpose.msra.mxu0 0.0
        %518 = vmatpush.xpose.msra.mxu0 0.0
        %519 = vmatpush.xpose.msra.mxu0 0.0
        %520 = vmatpush.xpose.msra.mxu0 0.0
        %521 = vmatpush.xpose.msra.mxu0 0.0
        %522 = vmatpush.xpose.msra.mxu0 0.0
        %523 = vmatpush.xpose.msra.mxu0 0.0
        %524 = vmatpush.xpose.msra.mxu0 0.0
        %525 = vmatpush.xpose.msra.mxu0 0.0
        %526 = vmatpush.xpose.msra.mxu0 0.0
        %527 = vmatpush.xpose.msra.mxu0 0.0
        %528 = vmatpush.xpose.msra.mxu0 %v512
        %529 = vmatpush.xpose.msra.mxu0 %v510
        %530 = vmatmul.f32.gmra.mxu0 %v505
        %v531 = vpop.f32.mrf.mxu0
        %v532 = vadd.f32 0.0, %v531
        %533 = vmatmul.f32.gmra.mxu0 %v508
        %v534 = vpop.f32.mrf.mxu0
        %v535 = vadd.f32 0.0, %v534
        %536 = vdwg.mxu0
        %v537 = vsel %vm495, %v532, -inf
        %v538 = vsel %vm496, %v535, -inf
        %vm539 = vcmask 130048
        %v540 = vsel %vm539, %v537, -inf
        %541 = vmax.xlane.f32.xlu0 %v540
        %v542 = vpop.xlane.xlu0 %541
        %v543 = vsel %vm539, %v538, -inf
        %544 = vmax.xlane.f32.xlu0 %v543
        %v545 = vpop.xlane.xlu0 %544
        %v546 = vsub.f32 %v537, %v542
        %v547 = vsub.f32 %v538, %v545
        %v548 = vmul.f32 %v546, 1.442695
        %v549 = vpow.pop %v548
        %v550 = vmul.f32 %v547, 1.442695
        %v551 = vpow.pop %v550
        %v552 = vsel %vm539, %v549, 0.0
        %553 = vadd.xlane.f32.xlu0 %v552
        %v554 = vpop.xlane.xlu0 %553
        %v555 = vsel %vm539, %v551, 0.0
        %556 = vadd.xlane.f32.xlu0 %v555
        %v557 = vpop.xlane.xlu0 %556
        %v558 = vrcp.pop %v554
        %v559 = vrcp.pop %v557
        %v560 = vmul.f32 %v549, %v558
        %v561 = vmul.f32 %v551, %v559
        %562 = vrot.lane.b32.xlu0 %v483, 64
        %v563 = vpop.permute.xlu0 %562
        %564 = vrot.lane.b32.xlu0 %v486, 64
        %v565 = vpop.permute.xlu0 %564
        %v569 = vsel %vm539, %v560, 0
        %v572 = vsel %vm539, %v561, 0
        %574 = vmatpush.msra.mxu0 0.0
        %575 = vmatpush.msra.mxu0 0.0
        %576 = vmatpush.msra.mxu0 0.0
        %577 = vmatpush.msra.mxu0 0.0
        %578 = vmatpush.msra.mxu0 0.0
        %579 = vmatpush.msra.mxu0 0.0
        %580 = vmatpush.msra.mxu0 0.0
        %581 = vmatpush.msra.mxu0 0.0
        %582 = vmatpush.msra.mxu0 0.0
        %583 = vmatpush.msra.mxu0 0.0
        %584 = vmatpush.msra.mxu0 0.0
        %585 = vmatpush.msra.mxu0 0.0
        %586 = vmatpush.msra.mxu0 0.0
        %587 = vmatpush.msra.mxu0 0.0
        %588 = vmatpush.msra.mxu0 %v565
        %589 = vmatpush.msra.mxu0 %v563
        %590 = vmatmul.f32.gmra.mxu0 %v569
        %v591 = vpop.f32.mrf.mxu0
        %v592 = vadd.f32 0.0, %v591
        %593 = vmatmul.f32.gmra.mxu0 %v572
        %v594 = vpop.f32.mrf.mxu0
        %v595 = vadd.f32 0.0, %v594
        %596 = vdwg.mxu0
        %597 = vrot.lane.b32.xlu0 %v488, 120
        %v598 = vpop.permute.xlu0 %597
        %599 = vrot.lane.b32.xlu0 %v489, 120
        %v600 = vpop.permute.xlu0 %599
        %601 = vrot.lane.b32.xlu0 %v483, 88
        %v602 = vpop.permute.xlu0 %601
        %603 = vrot.lane.b32.xlu0 %v486, 88
        %v604 = vpop.permute.xlu0 %603
        %v605 = vsel %vm503, %v598, 0
        %v607 = vsel %vm503, %v600, 0
        %v609 = vsel %vm503, %v602, 0
        %v611 = vsel %vm503, %v604, 0
        %613 = vmatpush.xpose.msra.mxu0 0.0
        %614 = vmatpush.xpose.msra.mxu0 0.0
        %615 = vmatpush.xpose.msra.mxu0 0.0
        %616 = vmatpush.xpose.msra.mxu0 0.0
        %617 = vmatpush.xpose.msra.mxu0 0.0
        %618 = vmatpush.xpose.msra.mxu0 0.0
        %619 = vmatpush.xpose.msra.mxu0 0.0
        %620 = vmatpush.xpose.msra.mxu0 0.0
        %621 = vmatpush.xpose.msra.mxu0 0.0
        %622 = vmatpush.xpose.msra.mxu0 0.0
        %623 = vmatpush.xpose.msra.mxu0 0.0
        %624 = vmatpush.xpose.msra.mxu0 0.0
        %625 = vmatpush.xpose.msra.mxu0 0.0
        %626 = vmatpush.xpose.msra.mxu0 0.0
        %627 = vmatpush.xpose.msra.mxu0 %v611
        %628 = vmatpush.xpose.msra.mxu0 %v609
        %629 = vmatmul.f32.gmra.mxu0 %v605
        %v630 = vpop.f32.mrf.mxu0
        %v631 = vadd.f32 0.0, %v630
        %632 = vmatmul.f32.gmra.mxu0 %v607
        %v633 = vpop.f32.mrf.mxu0
        %v634 = vadd.f32 0.0, %v633
        %635 = vdwg.mxu0
        %v636 = vsel %vm495, %v631, -inf
        %v637 = vsel %vm496, %v634, -inf
        %v638 = vsel %vm539, %v636, -inf
        %639 = vmax.xlane.f32.xlu0 %v638
        %v640 = vpop.xlane.xlu0 %639
        %v641 = vsel %vm539, %v637, -inf
        %642 = vmax.xlane.f32.xlu0 %v641
        %v643 = vpop.xlane.xlu0 %642
        %v644 = vsub.f32 %v636, %v640
        %v645 = vsub.f32 %v637, %v643
        %v646 = vmul.f32 %v644, 1.442695
        %v647 = vpow.pop %v646
        %v648 = vmul.f32 %v645, 1.442695
        %v649 = vpow.pop %v648
        %v650 = vsel %vm539, %v647, 0.0
        %651 = vadd.xlane.f32.xlu0 %v650
        %v652 = vpop.xlane.xlu0 %651
        %v653 = vsel %vm539, %v649, 0.0
        %654 = vadd.xlane.f32.xlu0 %v653
        %v655 = vpop.xlane.xlu0 %654
        %v656 = vrcp.pop %v652
        %v657 = vrcp.pop %v655
        %v658 = vmul.f32 %v647, %v656
        %v659 = vmul.f32 %v649, %v657
        %660 = vrot.lane.b32.xlu0 %v483, 56
        %v661 = vpop.permute.xlu0 %660
        %662 = vrot.lane.b32.xlu0 %v486, 56
        %v663 = vpop.permute.xlu0 %662
        %v667 = vsel %vm539, %v658, 0
        %v670 = vsel %vm539, %v659, 0
        %672 = vmatpush.msra.mxu0 0.0
        %673 = vmatpush.msra.mxu0 0.0
        %674 = vmatpush.msra.mxu0 0.0
        %675 = vmatpush.msra.mxu0 0.0
        %676 = vmatpush.msra.mxu0 0.0
        %677 = vmatpush.msra.mxu0 0.0
        %678 = vmatpush.msra.mxu0 0.0
        %679 = vmatpush.msra.mxu0 0.0
        %680 = vmatpush.msra.mxu0 0.0
        %681 = vmatpush.msra.mxu0 0.0
        %682 = vmatpush.msra.mxu0 0.0
        %683 = vmatpush.msra.mxu0 0.0
        %684 = vmatpush.msra.mxu0 0.0
        %685 = vmatpush.msra.mxu0 0.0
        %686 = vmatpush.msra.mxu0 %v663
        %687 = vmatpush.msra.mxu0 %v661
        %688 = vmatmul.f32.gmra.mxu0 %v667
        %v689 = vpop.f32.mrf.mxu0
        %v690 = vadd.f32 0.0, %v689
        %691 = vmatmul.f32.gmra.mxu0 %v670
        %v692 = vpop.f32.mrf.mxu0
        %v693 = vadd.f32 0.0, %v692
        %694 = vdwg.mxu0
        %695 = vrot.lane.b32.xlu0 %v488, 112
        %v696 = vpop.permute.xlu0 %695
        %697 = vrot.lane.b32.xlu0 %v489, 112
        %v698 = vpop.permute.xlu0 %697
        %699 = vrot.lane.b32.xlu0 %v483, 80
        %v700 = vpop.permute.xlu0 %699
        %701 = vrot.lane.b32.xlu0 %v486, 80
        %v702 = vpop.permute.xlu0 %701
        %v703 = vsel %vm503, %v696, 0
        %v705 = vsel %vm503, %v698, 0
        %v707 = vsel %vm503, %v700, 0
        %v709 = vsel %vm503, %v702, 0
        %711 = vmatpush.xpose.msra.mxu0 0.0
        %712 = vmatpush.xpose.msra.mxu0 0.0
        %713 = vmatpush.xpose.msra.mxu0 0.0
        %714 = vmatpush.xpose.msra.mxu0 0.0
        %715 = vmatpush.xpose.msra.mxu0 0.0
        %716 = vmatpush.xpose.msra.mxu0 0.0
        %717 = vmatpush.xpose.msra.mxu0 0.0
        %718 = vmatpush.xpose.msra.mxu0 0.0
        %719 = vmatpush.xpose.msra.mxu0 0.0
        %720 = vmatpush.xpose.msra.mxu0 0.0
        %721 = vmatpush.xpose.msra.mxu0 0.0
        %722 = vmatpush.xpose.msra.mxu0 0.0
        %723 = vmatpush.xpose.msra.mxu0 0.0
        %724 = vmatpush.xpose.msra.mxu0 0.0
        %725 = vmatpush.xpose.msra.mxu0 %v709
        %726 = vmatpush.xpose.msra.mxu0 %v707
        %727 = vmatmul.f32.gmra.mxu0 %v703
        %v728 = vpop.f32.mrf.mxu0
        %v729 = vadd.f32 0.0, %v728
        %730 = vmatmul.f32.gmra.mxu0 %v705
        %v731 = vpop.f32.mrf.mxu0
        %v732 = vadd.f32 0.0, %v731
        %733 = vdwg.mxu0
        %v734 = vsel %vm495, %v729, -inf
        %v735 = vsel %vm496, %v732, -inf
        %v736 = vsel %vm539, %v734, -inf
        %737 = vmax.xlane.f32.xlu0 %v736
        %v738 = vpop.xlane.xlu0 %737
        %v739 = vsel %vm539, %v735, -inf
        %740 = vmax.xlane.f32.xlu0 %v739
        %v741 = vpop.xlane.xlu0 %740
        %v742 = vsub.f32 %v734, %v738
        %v743 = vsub.f32 %v735, %v741
        %v744 = vmul.f32 %v742, 1.442695
        %v745 = vpow.pop %v744
        %v746 = vmul.f32 %v743, 1.442695
        %v747 = vpow.pop %v746
        %v748 = vsel %vm539, %v745, 0.0
        %749 = vadd.xlane.f32.xlu0 %v748
        %v750 = vpop.xlane.xlu0 %749
        %v751 = vsel %vm539, %v747, 0.0
        %752 = vadd.xlane.f32.xlu0 %v751
        %v753 = vpop.xlane.xlu0 %752
        %v754 = vrcp.pop %v750
        %v755 = vrcp.pop %v753
        %v756 = vmul.f32 %v745, %v754
        %v757 = vmul.f32 %v747, %v755
        %758 = vrot.lane.b32.xlu0 %v483, 48
        %v759 = vpop.permute.xlu0 %758
        %760 = vrot.lane.b32.xlu0 %v486, 48
        %v761 = vpop.permute.xlu0 %760
        %v765 = vsel %vm539, %v756, 0
        %v768 = vsel %vm539, %v757, 0
        %770 = vmatpush.msra.mxu0 0.0
        %771 = vmatpush.msra.mxu0 0.0
        %772 = vmatpush.msra.mxu0 0.0
        %773 = vmatpush.msra.mxu0 0.0
        %774 = vmatpush.msra.mxu0 0.0
        %775 = vmatpush.msra.mxu0 0.0
        %776 = vmatpush.msra.mxu0 0.0
        %777 = vmatpush.msra.mxu0 0.0
        %778 = vmatpush.msra.mxu0 0.0
        %779 = vmatpush.msra.mxu0 0.0
        %780 = vmatpush.msra.mxu0 0.0
        %781 = vmatpush.msra.mxu0 0.0
        %782 = vmatpush.msra.mxu0 0.0
        %783 = vmatpush.msra.mxu0 0.0
        %784 = vmatpush.msra.mxu0 %v761
        %785 = vmatpush.msra.mxu0 %v759
        %786 = vmatmul.f32.gmra.mxu0 %v765
        %v787 = vpop.f32.mrf.mxu0
        %v788 = vadd.f32 0.0, %v787
        %789 = vmatmul.f32.gmra.mxu0 %v768
        %v790 = vpop.f32.mrf.mxu0
        %v791 = vadd.f32 0.0, %v790
        %792 = vdwg.mxu0
        %793 = vrot.lane.b32.xlu0 %v488, 104
        %v794 = vpop.permute.xlu0 %793
        %795 = vrot.lane.b32.xlu0 %v489, 104
        %v796 = vpop.permute.xlu0 %795
        %797 = vrot.lane.b32.xlu0 %v483, 72
        %v798 = vpop.permute.xlu0 %797
        %799 = vrot.lane.b32.xlu0 %v486, 72
        %v800 = vpop.permute.xlu0 %799
        %v801 = vsel %vm503, %v794, 0
        %v803 = vsel %vm503, %v796, 0
        %v805 = vsel %vm503, %v798, 0
        %v807 = vsel %vm503, %v800, 0
        %809 = vmatpush.xpose.msra.mxu0 0.0
        %810 = vmatpush.xpose.msra.mxu0 0.0
        %811 = vmatpush.xpose.msra.mxu0 0.0
        %812 = vmatpush.xpose.msra.mxu0 0.0
        %813 = vmatpush.xpose.msra.mxu0 0.0
        %814 = vmatpush.xpose.msra.mxu0 0.0
        %815 = vmatpush.xpose.msra.mxu0 0.0
        %816 = vmatpush.xpose.msra.mxu0 0.0
        %817 = vmatpush.xpose.msra.mxu0 0.0
        %818 = vmatpush.xpose.msra.mxu0 0.0
        %819 = vmatpush.xpose.msra.mxu0 0.0
        %820 = vmatpush.xpose.msra.mxu0 0.0
        %821 = vmatpush.xpose.msra.mxu0 0.0
        %822 = vmatpush.xpose.msra.mxu0 0.0
        %823 = vmatpush.xpose.msra.mxu0 %v807
        %824 = vmatpush.xpose.msra.mxu0 %v805
        %825 = vmatmul.f32.gmra.mxu0 %v801
        %v826 = vpop.f32.mrf.mxu0
        %v827 = vadd.f32 0.0, %v826
        %828 = vmatmul.f32.gmra.mxu0 %v803
        %v829 = vpop.f32.mrf.mxu0
        %v830 = vadd.f32 0.0, %v829
        %831 = vdwg.mxu0
        %v832 = vsel %vm495, %v827, -inf
        %v833 = vsel %vm496, %v830, -inf
        %v834 = vsel %vm539, %v832, -inf
        %835 = vmax.xlane.f32.xlu0 %v834
        %v836 = vpop.xlane.xlu0 %835
        %v837 = vsel %vm539, %v833, -inf
        %838 = vmax.xlane.f32.xlu0 %v837
        %v839 = vpop.xlane.xlu0 %838
        %v840 = vsub.f32 %v832, %v836
        %v841 = vsub.f32 %v833, %v839
        %v842 = vmul.f32 %v840, 1.442695
        %v843 = vpow.pop %v842
        %v844 = vmul.f32 %v841, 1.442695
        %v845 = vpow.pop %v844
        %v846 = vsel %vm539, %v843, 0.0
        %847 = vadd.xlane.f32.xlu0 %v846
        %v848 = vpop.xlane.xlu0 %847
        %v849 = vsel %vm539, %v845, 0.0
        %850 = vadd.xlane.f32.xlu0 %v849
        %v851 = vpop.xlane.xlu0 %850
        %v852 = vrcp.pop %v848
        %v853 = vrcp.pop %v851
        %v854 = vmul.f32 %v843, %v852
        %v855 = vmul.f32 %v845, %v853
        %856 = vrot.lane.b32.xlu0 %v483, 40
        %v857 = vpop.permute.xlu0 %856
        %858 = vrot.lane.b32.xlu0 %v486, 40
        %v859 = vpop.permute.xlu0 %858
        %v863 = vsel %vm539, %v854, 0
        %v866 = vsel %vm539, %v855, 0
        %868 = vmatpush.msra.mxu0 0.0
        %869 = vmatpush.msra.mxu0 0.0
        %870 = vmatpush.msra.mxu0 0.0
        %871 = vmatpush.msra.mxu0 0.0
        %872 = vmatpush.msra.mxu0 0.0
        %873 = vmatpush.msra.mxu0 0.0
        %874 = vmatpush.msra.mxu0 0.0
        %875 = vmatpush.msra.mxu0 0.0
        %876 = vmatpush.msra.mxu0 0.0
        %877 = vmatpush.msra.mxu0 0.0
        %878 = vmatpush.msra.mxu0 0.0
        %879 = vmatpush.msra.mxu0 0.0
        %880 = vmatpush.msra.mxu0 0.0
        %881 = vmatpush.msra.mxu0 0.0
        %882 = vmatpush.msra.mxu0 %v859
        %883 = vmatpush.msra.mxu0 %v857
        %884 = vmatmul.f32.gmra.mxu0 %v863
        %v885 = vpop.f32.mrf.mxu0
        %v886 = vadd.f32 0.0, %v885
        %887 = vmatmul.f32.gmra.mxu0 %v866
        %v888 = vpop.f32.mrf.mxu0
        %v889 = vadd.f32 0.0, %v888
        %890 = vdwg.mxu0
        %893 = vrot.lane.b32.xlu0 %v690, 8
        %v894 = vpop.permute.xlu0 %893
        %895 = vrot.lane.b32.xlu0 %v693, 8
        %v896 = vpop.permute.xlu0 %895
        %901 = vrot.lane.b32.xlu0 %v788, 16
        %v902 = vpop.permute.xlu0 %901
        %903 = vrot.lane.b32.xlu0 %v791, 16
        %v904 = vpop.permute.xlu0 %903
        %909 = vrot.lane.b32.xlu0 %v886, 24
        %v910 = vpop.permute.xlu0 %909
        %911 = vrot.lane.b32.xlu0 %v889, 24
        %v912 = vpop.permute.xlu0 %911
        %v915 = vsel %vm503, %v592, %v894
        %v916 = vsel %vm503, %v595, %v896
        %v917 = vsel %vm539, %v915, %v902
        %v918 = vsel %vm539, %v916, %v904
        %vm919 = vcmask 195584
        %v920 = vsel %vm919, %v917, %v910
        %v921 = vsel %vm919, %v918, %v912
        %v922 = vadd.f32 %v385, %v920
        %v923 = vadd.f32 %v386, %v921
        %v924 = vld [vmem:[%s5] sm:$0x1]
        %v925 = vld [vmem:[%s6] sm:$0x1]
        %v926 = vsel %vm389, %v922, 0.0
        %927 = vadd.xlane.f32.xlu0 %v926
        %v928 = vpop.xlane.xlu0 %927
        %v929 = vsel %vm389, %v923, 0.0
        %930 = vadd.xlane.f32.xlu0 %v929
        %v931 = vpop.xlane.xlu0 %930
        %v932 = vmul.f32 %v928, %v402
        %v933 = vmul.f32 %v931, %v402
        %v934 = vsub.f32 %v922, %v932
        %v935 = vsub.f32 %v923, %v933
        %v936 = vmul.f32 %v934, %v934
        %v937 = vmul.f32 %v935, %v935
        %v938 = vsel %vm389, %v936, 0.0
        %939 = vadd.xlane.f32.xlu0 %v938
        %v940 = vpop.xlane.xlu0 %939
        %v941 = vsel %vm389, %v937, 0.0
        %942 = vadd.xlane.f32.xlu0 %v941
        %v943 = vpop.xlane.xlu0 %942
        %v944 = vmul.f32 %v940, %v402
        %v945 = vmul.f32 %v943, %v402
        %v946 = vadd.f32 %v944, 1e-05
        %v947 = vadd.f32 %v945, 1e-05
        %v948 = vrsqrt.pop %v946
        %v949 = vmul.f32 %v948, %v946
        %v950 = vmul.f32 %v949, %v948
        %v951 = vmul.f32 0.5, %v950
        %v952 = vsub.f32 1.5, %v951
        %v953 = vmul.f32 %v948, %v952
        %vm954 = vweird.f32 %v946
        %vm955 = vweird.f32 %v948
        %vm956 = vmor %vm954, %vm955
        %v957 = vsel %vm956, %v948, %v953
        %v958 = vrsqrt.pop %v947
        %v959 = vmul.f32 %v958, %v947
        %v960 = vmul.f32 %v959, %v958
        %v961 = vmul.f32 0.5, %v960
        %v962 = vsub.f32 1.5, %v961
        %v963 = vmul.f32 %v958, %v962
        %vm964 = vweird.f32 %v947
        %vm965 = vweird.f32 %v958
        %vm966 = vmor %vm964, %vm965
        %v967 = vsel %vm966, %v958, %v963
        %v968 = vmul.f32 %v934, %v957
        %v969 = vmul.f32 %v935, %v967
        %v971 = vperm.slane %v924, 0
        %v973 = vmul.f32 %v968, %v971
        %v974 = vmul.f32 %v969, %v971
        %v976 = vperm.slane %v925, 0
        %v978 = vadd.f32 %v973, %v976
        %v979 = vadd.f32 %v974, %v976
        %v980 = vld [vmem:[%s7] sm:$0xff]
        %v981 = vld [vmem:[%s7 + $0x8] sm:$0xff]
        %v982 = vld [vmem:[%s7 + $0x10] sm:$0xff]
        %v983 = vld [vmem:[%s7 + $0x18] sm:$0xff]
        %v984 = vld [vmem:[%s8] sm:$0x1]
        %v986 = vperm.slane %v984, 0
        %v989 = vsel %vm389, %v978, 0
        %v992 = vsel %vm389, %v979, 0
        %994 = vmatpush.msra.mxu0 0.0
        %995 = vmatpush.msra.mxu0 0.0
        %996 = vmatpush.msra.mxu0 0.0
        %997 = vmatpush.msra.mxu0 0.0
        %998 = vmatpush.msra.mxu0 0.0
        %999 = vmatpush.msra.mxu0 0.0
        %1000 = vmatpush.msra.mxu0 0.0
        %1001 = vmatpush.msra.mxu0 0.0
        %1002 = vmatpush.msra.mxu0 0.0
        %1003 = vmatpush.msra.mxu0 0.0
        %1004 = vmatpush.msra.mxu0 0.0
        %1005 = vmatpush.msra.mxu0 0.0
        %1006 = vmatpush.msra.mxu0 %v983
        %1007 = vmatpush.msra.mxu0 %v982
        %1008 = vmatpush.msra.mxu0 %v981
        %1009 = vmatpush.msra.mxu0 %v980
        %1010 = vmatmul.f32.gmra.mxu0 %v989
        %v1011 = vpop.f32.mrf.mxu0
        %v1012 = vadd.f32 %v986, %v1011
        %1013 = vmatmul.f32.gmra.mxu0 %v992
        %v1014 = vpop.f32.mrf.mxu0
        %v1015 = vadd.f32 %v986, %v1014
        %1016 = vdwg.mxu0
        %v1017 = vmul.f32 %v1012, %v1012
        %v1018 = vmul.f32 %v1015, %v1015
        %v1019 = vmul.f32 %v1012, %v1017
        %v1020 = vmul.f32 %v1015, %v1018
        %v1021 = vmul.f32 %v1019, 0.044715
        %v1022 = vmul.f32 %v1020, 0.044715
        %v1023 = vadd.f32 %v1012, %v1021
        %v1024 = vadd.f32 %v1015, %v1022
        %v1025 = vmul.f32 %v1023, 0.7978846
        %v1026 = vmul.f32 %v1024, 0.7978846
        %v1027 = vtanh.pop %v1025
        %v1028 = vtanh.pop %v1026
        %v1029 = vadd.f32 %v1027, 1.0
        %v1030 = vadd.f32 %v1028, 1.0
        %v1031 = vmul.f32 %v1029, 0.5
        %v1032 = vmul.f32 %v1030, 0.5
        %v1033 = vmul.f32 %v1012, %v1031
        %v1034 = vmul.f32 %v1015, %v1032
        %v1035 = vld [vmem:[%s9] sm:$0xff]
        %v1036 = vld [vmem:[%s9 + $0x8] sm:$0xff]
        %v1037 = vld [vmem:[%s9 + $0x10] sm:$0xff]
        %v1038 = vld [vmem:[%s9 + $0x18] sm:$0xff]
        %v1039 = vld [vmem:[%s9 + $0x20] sm:$0xff]
        %v1040 = vld [vmem:[%s9 + $0x28] sm:$0xff]
        %v1041 = vld [vmem:[%s9 + $0x30] sm:$0xff]
        %v1042 = vld [vmem:[%s9 + $0x38] sm:$0xff]
        %v1043 = vld [vmem:[%s9 + $0x40] sm:$0xff]
        %v1044 = vld [vmem:[%s9 + $0x48] sm:$0xff]
        %v1045 = vld [vmem:[%s9 + $0x50] sm:$0xff]
        %v1046 = vld [vmem:[%s9 + $0x58] sm:$0xff]
        %v1047 = vld [vmem:[%s9 + $0x60] sm:$0xff]
        %v1048 = vld [vmem:[%s9 + $0x68] sm:$0xff]
        %v1049 = vld [vmem:[%s9 + $0x70] sm:$0xff]
        %v1050 = vld [vmem:[%s9 + $0x78] sm:$0xff]
        %v1051 = vld [vmem:[%s10] sm:$0x1]
        %v1053 = vperm.slane %v1051, 0
        %1055 = vmatpush.msra.mxu0 %v1050
        %1056 = vmatpush.msra.mxu0 %v1049
        %1057 = vmatpush.msra.mxu0 %v1048
        %1058 = vmatpush.msra.mxu0 %v1047
        %1059 = vmatpush.msra.mxu0 %v1046
        %1060 = vmatpush.msra.mxu0 %v1045
        %1061 = vmatpush.msra.mxu0 %v1044
        %1062 = vmatpush.msra.mxu0 %v1043
        %1063 = vmatpush.msra.mxu0 %v1042
        %1064 = vmatpush.msra.mxu0 %v1041
        %1065 = vmatpush.msra.mxu0 %v1040
        %1066 = vmatpush.msra.mxu0 %v1039
        %1067 = vmatpush.msra.mxu0 %v1038
        %1068 = vmatpush.msra.mxu0 %v1037
        %1069 = vmatpush.msra.mxu0 %v1036
        %1070 = vmatpush.msra.mxu0 %v1035
        %1071 = vmatmul.f32.gmra.mxu0 %v1033
        %v1072 = vpop.f32.mrf.mxu0
        %v1073 = vadd.f32 %v1053, %v1072
        %1074 = vmatmul.f32.gmra.mxu0 %v1034
        %v1075 = vpop.f32.mrf.mxu0
        %v1076 = vadd.f32 %v1053, %v1075
        %1077 = vdwg.mxu0
        %v1078 = vadd.f32 %v922, %v1073
        %v1079 = vadd.f32 %v923, %v1076
        %1080 = vst.msk [vmem:[%s379] sm:$0xff] %vm389, %v1078
        %1081 = vst.msk [vmem:[%s379 + $0x8] sm:$0xff] %vm389, %v1079
        %s1082 = sand.u32 %s269, 1
        %s1083 = scalar_lea.sflag [#allocation3], %s1082
        %s1084 = sand.u32 %s269, 1
        %s1085 = smul.addr %s1084, 16
        %s1086 = scalar_lea.vmem [#allocation2], %s1085
        // Predicated region
        $region65: #{tpu_custom_call.1} parent=63 // pred_check
          %p1087 = pneg %p279
        $region66: #{tpu_custom_call.1} parent=63 // pred_check_branch
          %1089 = sbr.rel (%p1087) target = $region68
        $region67: #{tpu_custom_call.1} parent=63 // pred_region
          %1091 = vsyncadd %s1083, 0
          %s1092 = smul.addr %s25, 2
          %s1093 = smul.addr %s1092, 8
          %s1094 = scalar_lea.hbm %s11, %s1093
          %s1095 = sshll.u32 %s1086, 4
          %s1096 = int_to_ptr.vmem [resolvable:$true] %s1095
          %s1097 = sshll.u32 %s1094, 4
          %s1098 = int_to_ptr.hbm [resolvable:$true] %s1097
          %1103 = dma.vmem_to_hbm [thread:$0]  %s1096, 256, %s1098, %s1083, 128, 128, 8
        $region68: #{tpu_custom_call.1} parent=63 // pred_fallthru
          _
      $region64: #{tpu_custom_call.1} parent=5 // pred_fallthru
        _
      %p1104 = scmp.le.s32.totalorder 2, %s20
      // Predicated region
      $region69: #{tpu_custom_call.1} parent=5 // pred_check
        %p1105 = pneg %p1104
      $region70: #{tpu_custom_call.1} parent=5 // pred_check_branch
        %1107 = sbr.rel (%p1105) target = $region72
      $region71: #{tpu_custom_call.1} parent=5 // pred_region
        %s1108 = ssub.s32 %s20, 2
        // Predicated region
        $region73: #{tpu_custom_call.1} parent=71 // pred_check
          %p1109 = pneg %p285
        $region74: #{tpu_custom_call.1} parent=71 // pred_check_branch
          %1111 = sbr.rel (%p1109) target = $region76
        $region75: #{tpu_custom_call.1} parent=71 // pred_region
          %s1112 = sand.u32 %s270, 1
          %s1113 = scalar_lea.sflag [#allocation3], %s1112
          %s1114 = sand.u32 %s270, 1
          %s1115 = smul.addr %s1114, 16
          %s1116 = scalar_lea.vmem [#allocation2], %s1115
          %1118 = dma.done %s1113, 256
        $region76: #{tpu_custom_call.1} parent=71 // pred_fallthru
          _
      $region72: #{tpu_custom_call.1} parent=5 // pred_fallthru
        _
    $region6: #{tpu_custom_call.1} parent=1 // loop_footer
      %s24 = sadd.s32 1, %s20
    $region7: #{tpu_custom_call.1} parent=1 // loop_footer_branch
      %19 = sbr.rel target = $region3
    $region8: #{tpu_custom_call.1} parent=1 // loop_exit
      _
    %1119 = vsyncpa [#allocation3], 1
    %s1120 = scalar_lea.sflag [#allocation3], 1
    %1121 = vsyncpa %s1120, 1

</llo_original>
